<compile_context>
chip_gen: v7x
topology: tpu7x:2x2x1
jax: 0.10.0
libtpu: 0.0.40
codegen_flags: <defaults>
</compile_context>

<pallas_src>
import math

import jax
import jax.numpy as jnp
from jax.experimental import pallas as pl
from jax.experimental.pallas import tpu as pltpu


def _make_basis(hidden_dim: int) -> jnp.ndarray:
    """(3, hidden_dim//2) frequency basis, matching the PyTorch __init__."""
    assert hidden_dim % 6 == 0
    k = hidden_dim // 6
    e = (2.0 ** jnp.arange(k, dtype=jnp.float32)) * math.pi          # (k,)
    z = jnp.zeros((k,), dtype=jnp.float32)
    row0 = jnp.concatenate([e, z, z])
    row1 = jnp.concatenate([z, e, z])
    row2 = jnp.concatenate([z, z, e])
    return jnp.stack([row0, row1, row2], axis=0)                     # (3, H/2)


def prepare_point_embed(basis, weight, bias):
    """One-time host-side prep so the per-call path does no slicing.

    basis:  (3, H/2)    weight: (H+3, dim)  (transposed from PyTorch (dim, H+3))
    bias:   (dim,)
    Returns fused operands for the kernel.
    """
    H2 = basis.shape[1]
    dim = weight.shape[1]
    basis2 = jnp.concatenate([basis, basis], axis=1)                 # (3, H)
    phase_off = jnp.concatenate(
        [jnp.zeros((1, H2), jnp.float32),
         jnp.full((1, H2), math.pi / 2, dtype=jnp.float32)], axis=1)  # (1, H)
    w_sincos = weight[:2 * H2, :]                                    # (H, dim)
    w_xyz = weight[2 * H2:, :]                                       # (3, dim)
    b2d = bias.reshape(1, dim)                                       # (1, dim)
    return basis2, phase_off, w_sincos, w_xyz, b2d


def _point_embed_kernel(x_ref, basis2_ref, off_ref, w_sc_ref, w_xyz_ref, b_ref,
                        o_ref):
    x = x_ref[...].astype(jnp.float32)                               # (tm, 3)
    x0 = x[:, 0:1]
    x1 = x[:, 1:2]
    x2 = x[:, 2:3]

    # phase = [proj, proj + pi/2]  ->  sin(phase) = [sin(proj), cos(proj)]
    b2 = basis2_ref[...]
    phase = x0 * b2[0:1, :] + x1 * b2[1:2, :] + x2 * b2[2:3, :] + off_ref[...]
    emb = jnp.sin(phase)                                             # (tm, H)

    # Linear over concat([sin, cos, x]) + bias.
    out = jnp.dot(emb, w_sc_ref[...], preferred_element_type=jnp.float32)
    w3 = w_xyz_ref[...]
    out = out + x0 * w3[0:1, :] + x1 * w3[1:2, :] + x2 * w3[2:3, :]
    out = out + b_ref[...]                                           # (1, dim)
    o_ref[...] = out.astype(o_ref.dtype)


def _choose_tm(M: int, target: int = 1024) -> int:
    """Row tile: multiple of 8, large (amortize per-step overhead), but keep
    >= 2 grid steps so both v7x TensorCores get work."""
    if M <= 8:
        return 8
    half = max(8, (M // 2) // 8 * 8)
    return min(target, half)


def point_embed_forward(x, params, *, tm=None, out_dtype=jnp.float32):
    """x: (B, N, 3) float32.  params: output of prepare_point_embed.
    Returns (B, N, dim) in out_dtype (bf16 allowed; accumulation stays f32)."""
    basis2, phase_off, w_sincos, w_xyz, b2d = params
    B, N, three = x.shape
    assert three == 3
    H = basis2.shape[1]
    dim = w_sincos.shape[1]
    M = B * N
    x2d = x.reshape(M, 3)
    if tm is None:
        tm = _choose_tm(M)

    grid = (pl.cdiv(M, tm),)
    out2d = pl.pallas_call(
        _point_embed_kernel,
        out_shape=jax.ShapeDtypeStruct((M, dim), out_dtype),
        grid_spec=pltpu.PrefetchScalarGridSpec(
            num_scalar_prefetch=0,
            grid=grid,
            in_specs=[
                pl.BlockSpec((tm, 3), lambda i: (i, 0)),      # points tile
                pl.BlockSpec((3, H), lambda i: (0, 0)),       # [basis, basis]
                pl.BlockSpec((1, H), lambda i: (0, 0)),       # [0, pi/2] offsets
                pl.BlockSpec((H, dim), lambda i: (0, 0)),     # Linear rows (sin,cos)
                pl.BlockSpec((3, dim), lambda i: (0, 0)),     # Linear rows (xyz)
                pl.BlockSpec((1, dim), lambda i: (0, 0)),     # bias
            ],
            out_specs=pl.BlockSpec((tm, dim), lambda i: (i, 0)),
        ),
        compiler_params=pltpu.CompilerParams(
            dimension_semantics=("parallel",)),
    )(x2d, basis2, phase_off, w_sincos, w_xyz, b2d)
    return out2d.reshape(B, N, dim)


def point_embed_reference(x, basis, weight, bias):
    """Plain-JAX reference mirroring the PyTorch forward (full f32 precision)."""
    proj = jnp.einsum('bnd,de->bne', x, basis,
                      precision=jax.lax.Precision.HIGHEST)
    emb = jnp.concatenate([jnp.sin(proj), jnp.cos(proj)], axis=2)
    feat = jnp.concatenate([emb, x], axis=2)
    return jnp.matmul(feat, weight, precision=jax.lax.Precision.HIGHEST) + bias


if __name__ == "__main__":
    hidden_dim = 48
    dim = 128

    key = jax.random.PRNGKey(0)
    kx, kw, kb, kx2 = jax.random.split(key, 4)

    # Deterministic synthetic parameters (no checkpoint load).
    basis = _make_basis(hidden_dim)                                  # (3, 24)
    fan_in = hidden_dim + 3
    bound = 1.0 / math.sqrt(fan_in)
    # PyTorch Linear stores weight as (dim, fan_in); kernel takes the transpose.
    weight = jax.random.uniform(kw, (fan_in, dim), jnp.float32, -bound, bound)
    bias = jax.random.uniform(kb, (dim,), jnp.float32, -bound, bound)
    params = prepare_point_embed(basis, weight, bias)

    # Case 1: small toy shape (B=2, N=8) -> M=16, tm=8, 2 grid steps.
    B, N = 2, 8
    x = jax.random.normal(kx, (B, N, 3), dtype=jnp.float32)
    out = jax.block_until_ready(point_embed_forward(x, params))
    ref = point_embed_reference(x, basis, weight, bias)
    assert out.shape == (B, N, dim)
    # Tolerance covers the cos(p)=sin(p+pi/2) fusion and split-matmul fp assoc.
    assert jnp.allclose(out, ref, atol=5e-4, rtol=5e-4), \
        float(jnp.max(jnp.abs(out - ref)))

    # Case 2: row count not divisible by the tile (exercises masked tail store).
    B2, N2 = 2, 100                                   # M=200, tm=96 -> 3 steps
    x2 = jax.random.normal(kx2, (B2, N2, 3), dtype=jnp.float32)
    out2 = jax.block_until_ready(point_embed_forward(x2, params))
    ref2 = point_embed_reference(x2, basis, weight, bias)
    assert out2.shape == (B2, N2, dim)
    assert jnp.allclose(out2, ref2, atol=5e-4, rtol=5e-4), \
        float(jnp.max(jnp.abs(out2 - ref2)))

    print("KERNEL_OK")
</pallas_src>

<mosaic_0001>
module attributes {stable_mosaic.version = 11 : i64} {
  func.func @_point_embed_kernel(%arg0: i32, %arg1: memref<8x3xf32, #tpu.memory_space<vmem>>, %arg2: memref<3x48xf32, #tpu.memory_space<vmem>>, %arg3: memref<1x48xf32, #tpu.memory_space<vmem>>, %arg4: memref<48x128xf32, #tpu.memory_space<vmem>>, %arg5: memref<3x128xf32, #tpu.memory_space<vmem>>, %arg6: memref<1x128xf32, #tpu.memory_space<vmem>>, %arg7: memref<8x128xf32, #tpu.memory_space<vmem>>) attributes {dimension_semantics = [#tpu.dimension_semantics<parallel>], iteration_bounds = array<i64: 2>, scalar_prefetch = 0 : i64, scratch_operands = 0 : i64, tpu.core_type = #tpu.core_type<tc>, window_params = [{transform_indices = @transform_0, window_bounds = array<i64: 8, 3>}, {pipeline_mode = #tpu.pipeline_mode<synchronous>, transform_indices = @transform_1, window_bounds = array<i64: 3, 48>}, {pipeline_mode = #tpu.pipeline_mode<synchronous>, transform_indices = @transform_2, window_bounds = array<i64: 1, 48>}, {pipeline_mode = #tpu.pipeline_mode<synchronous>, transform_indices = @transform_3, window_bounds = array<i64: 48, 128>}, {pipeline_mode = #tpu.pipeline_mode<synchronous>, transform_indices = @transform_4, window_bounds = array<i64: 3, 128>}, {pipeline_mode = #tpu.pipeline_mode<synchronous>, transform_indices = @transform_5, window_bounds = array<i64: 1, 128>}, {transform_indices = @transform_6, window_bounds = array<i64: 8, 128>}]} {
    %c0 = arith.constant 0 : index
    %c0_0 = arith.constant 0 : index
    %0 = vector.load %arg1[%c0, %c0_0] : memref<8x3xf32, #tpu.memory_space<vmem>>, vector<8x3xf32>
    %1 = vector.extract_strided_slice %0 {offsets = [0, 0], sizes = [8, 1], strides = [1, 1]} : vector<8x3xf32> to vector<8x1xf32>
    %2 = vector.extract_strided_slice %0 {offsets = [0, 1], sizes = [8, 1], strides = [1, 1]} : vector<8x3xf32> to vector<8x1xf32>
    %3 = vector.extract_strided_slice %0 {offsets = [0, 2], sizes = [8, 1], strides = [1, 1]} : vector<8x3xf32> to vector<8x1xf32>
    %c0_1 = arith.constant 0 : index
    %c0_2 = arith.constant 0 : index
    %4 = vector.load %arg2[%c0_1, %c0_2] : memref<3x48xf32, #tpu.memory_space<vmem>>, vector<3x48xf32>
    %5 = vector.extract_strided_slice %4 {offsets = [0, 0], sizes = [1, 48], strides = [1, 1]} : vector<3x48xf32> to vector<1x48xf32>
    %6 = vector.broadcast %1 : vector<8x1xf32> to vector<8x48xf32>
    %7 = vector.broadcast %5 : vector<1x48xf32> to vector<8x48xf32>
    %8 = arith.mulf %6, %7 : vector<8x48xf32>
    %9 = vector.extract_strided_slice %4 {offsets = [1, 0], sizes = [1, 48], strides = [1, 1]} : vector<3x48xf32> to vector<1x48xf32>
    %10 = vector.broadcast %2 : vector<8x1xf32> to vector<8x48xf32>
    %11 = vector.broadcast %9 : vector<1x48xf32> to vector<8x48xf32>
    %12 = arith.mulf %10, %11 : vector<8x48xf32>
    %13 = arith.addf %8, %12 : vector<8x48xf32>
    %14 = vector.extract_strided_slice %4 {offsets = [2, 0], sizes = [1, 48], strides = [1, 1]} : vector<3x48xf32> to vector<1x48xf32>
    %15 = vector.broadcast %3 : vector<8x1xf32> to vector<8x48xf32>
    %16 = vector.broadcast %14 : vector<1x48xf32> to vector<8x48xf32>
    %17 = arith.mulf %15, %16 : vector<8x48xf32>
    %18 = arith.addf %13, %17 : vector<8x48xf32>
    %c0_3 = arith.constant 0 : index
    %c0_4 = arith.constant 0 : index
    %19 = vector.load %arg3[%c0_3, %c0_4] : memref<1x48xf32, #tpu.memory_space<vmem>>, vector<1x48xf32>
    %20 = vector.broadcast %19 : vector<1x48xf32> to vector<8x48xf32>
    %21 = arith.addf %18, %20 : vector<8x48xf32>
    %22 = math.sin %21 : vector<8x48xf32>
    %c0_5 = arith.constant 0 : index
    %c0_6 = arith.constant 0 : index
    %23 = vector.load %arg4[%c0_5, %c0_6] : memref<48x128xf32, #tpu.memory_space<vmem>>, vector<48x128xf32>
    %cst = arith.constant dense<0.000000e+00> : vector<8x128xf32>
    %24 = tpu.matmul %22, %23, %cst {dimension_numbers = #tpu.dot_dimension_numbers<[1], [0], [0], [1], [0, 0, 1, 1], [], []>} : vector<8x48xf32>, vector<48x128xf32>, vector<8x128xf32> -> vector<8x128xf32>
    %c0_7 = arith.constant 0 : index
    %c0_8 = arith.constant 0 : index
    %25 = vector.load %arg5[%c0_7, %c0_8] : memref<3x128xf32, #tpu.memory_space<vmem>>, vector<3x128xf32>
    %26 = vector.extract_strided_slice %25 {offsets = [0, 0], sizes = [1, 128], strides = [1, 1]} : vector<3x128xf32> to vector<1x128xf32>
    %27 = vector.broadcast %1 : vector<8x1xf32> to vector<8x128xf32>
    %28 = vector.broadcast %26 : vector<1x128xf32> to vector<8x128xf32>
    %29 = arith.mulf %27, %28 : vector<8x128xf32>
    %30 = arith.addf %24, %29 : vector<8x128xf32>
    %31 = vector.extract_strided_slice %25 {offsets = [1, 0], sizes = [1, 128], strides = [1, 1]} : vector<3x128xf32> to vector<1x128xf32>
    %32 = vector.broadcast %2 : vector<8x1xf32> to vector<8x128xf32>
    %33 = vector.broadcast %31 : vector<1x128xf32> to vector<8x128xf32>
    %34 = arith.mulf %32, %33 : vector<8x128xf32>
    %35 = arith.addf %30, %34 : vector<8x128xf32>
    %36 = vector.extract_strided_slice %25 {offsets = [2, 0], sizes = [1, 128], strides = [1, 1]} : vector<3x128xf32> to vector<1x128xf32>
    %37 = vector.broadcast %3 : vector<8x1xf32> to vector<8x128xf32>
    %38 = vector.broadcast %36 : vector<1x128xf32> to vector<8x128xf32>
    %39 = arith.mulf %37, %38 : vector<8x128xf32>
    %40 = arith.addf %35, %39 : vector<8x128xf32>
    %c0_9 = arith.constant 0 : index
    %c0_10 = arith.constant 0 : index
    %41 = vector.load %arg6[%c0_9, %c0_10] : memref<1x128xf32, #tpu.memory_space<vmem>>, vector<1x128xf32>
    %42 = vector.broadcast %41 : vector<1x128xf32> to vector<8x128xf32>
    %43 = arith.addf %40, %42 : vector<8x128xf32>
    %c0_11 = arith.constant 0 : index
    %c0_12 = arith.constant 0 : index
    %44 = vector.load %arg7[%c0_11, %c0_12] : memref<8x128xf32, #tpu.memory_space<vmem>>, vector<8x128xf32>
    tpu.vector_store %arg7[%c0_11, %c0_12], %43 {strides = array<i32>} : memref<8x128xf32, #tpu.memory_space<vmem>>, vector<8x128xf32>,
    return
  }
  func.func @transform_0(%arg0: i32) -> (i32, i32) {
    %c0_i32 = arith.constant 0 : i32
    %c0_i32_0 = arith.constant 0 : i32
    return %arg0, %c0_i32 : i32, i32
  }
  func.func @transform_1(%arg0: i32) -> (i32, i32) {
    %c0_i32 = arith.constant 0 : i32
    %c0_i32_0 = arith.constant 0 : i32
    %c0_i32_1 = arith.constant 0 : i32
    return %c0_i32, %c0_i32_0 : i32, i32
  }
  func.func @transform_2(%arg0: i32) -> (i32, i32) {
    %c0_i32 = arith.constant 0 : i32
    %c0_i32_0 = arith.constant 0 : i32
    %c0_i32_1 = arith.constant 0 : i32
    return %c0_i32, %c0_i32_0 : i32, i32
  }
  func.func @transform_3(%arg0: i32) -> (i32, i32) {
    %c0_i32 = arith.constant 0 : i32
    %c0_i32_0 = arith.constant 0 : i32
    %c0_i32_1 = arith.constant 0 : i32
    return %c0_i32, %c0_i32_0 : i32, i32
  }
  func.func @transform_4(%arg0: i32) -> (i32, i32) {
    %c0_i32 = arith.constant 0 : i32
    %c0_i32_0 = arith.constant 0 : i32
    %c0_i32_1 = arith.constant 0 : i32
    return %c0_i32, %c0_i32_0 : i32, i32
  }
  func.func @transform_5(%arg0: i32) -> (i32, i32) {
    %c0_i32 = arith.constant 0 : i32
    %c0_i32_0 = arith.constant 0 : i32
    %c0_i32_1 = arith.constant 0 : i32
    return %c0_i32, %c0_i32_0 : i32, i32
  }
  func.func @transform_6(%arg0: i32) -> (i32, i32) {
    %c0_i32 = arith.constant 0 : i32
    %c0_i32_0 = arith.constant 0 : i32
    return %arg0, %c0_i32 : i32, i32
  }
}

</mosaic_0001>

<llo_original>
// kernel: tpu_custom_call.1
$region0: #{tpu_custom_call.1}
  #allocation0 [shape = 'u32[]', space=smem, size = 0x4, offset = 0x4, fixed_abs, tag = 'smem constant byte address 0x4 - core index']
  #allocation1 [shape = 'u32[144,128]{1,0:T(1,128)}', space=vmem, size = 0x12000, scoped, tag = 'internal scratch']
  %s0 = inlined_call_operand.vmem [shape: f32[16,3], index: 0, kind: input, shape index: {}]
  %s1 = inlined_call_operand.vmem [shape: f32[3,48], index: 1, kind: input, shape index: {}]
  %s2 = inlined_call_operand.vmem [shape: f32[1,48], index: 2, kind: input, shape index: {}]
  %s3 = inlined_call_operand.hbm [shape: f32[48,128], index: 3, kind: input, shape index: {}]
  %s4 = inlined_call_operand.vmem [shape: f32[3,128], index: 4, kind: input, shape index: {}]
  %s5 = inlined_call_operand.vmem [shape: f32[1,128], index: 5, kind: input, shape index: {}]
  %s6 = inlined_call_operand.hbm [shape: f32[16,128], index: 6, kind: output, shape index: {}]
  %s7 = sld [smem:[#allocation0]]
  $region61: #{tpu_custom_call.1} parent=0
    _
  %s9 = ssub.s32 1, %s7
  %s10 = scalar_select 0, %s9, %s7
  $region1: #{tpu_custom_call.1} parent=0
    #allocation2 [shape = 'u8[24576]{0}', space=vmem, size = 0x6000, scoped, tag = 'input window, operand 3, single buffered']
    #allocation3 [shape = 's32[2]{0}', space=sflag, size = 0x8, scoped, tag = 'scoped memory for tpu_custom_call.1']
    #allocation4 [shape = 's32[2]{0}', space=sflag, size = 0x8, scoped, tag = 'scoped memory for tpu_custom_call.1']
    #allocation5 [shape = 'u8[8192]{0}', space=vmem, size = 0x2000, scoped, tag = 'output window, operand 0']
    %11 = vsyncpa [#allocation3], 0
    %12 = vsyncpa [#allocation4], 0
    %s13 = scalar_lea.sflag [#allocation4], 1
    %14 = vsyncpa %s13, 0
    loop: start=0, step=1, limit=4
    $region2: #{tpu_custom_call.1} parent=1 // loop_pre_header
      _
    $region3: #{tpu_custom_call.1} parent=1 // loop_header
      %s16 = sphi 0, %s20
      %p17 = scmp.ge.s32.totalorder %s16, 4
      %s26 = sphi 0, %s28
      %s29 = sphi 0, %s26
      %s30 = sphi 0, %s29
      %s46 = sphi 0, %s30
      %s50 = sphi 0, %s50
      %s52 = sphi 0, %s50
      %s53 = sphi 0, %s52
      %s67 = sphi 0, %s53
      %s71 = sphi 0, %s71
      %s73 = sphi 0, %s71
      %s74 = sphi 0, %s73
      %s88 = sphi 0, %s74
      %s92 = sphi 0, %s92
      %s94 = sphi 0, %s92
      %s95 = sphi 0, %s94
      %s109 = sphi 0, %s95
      %s113 = sphi 0, %s113
      %s115 = sphi 0, %s113
      %s116 = sphi 0, %s115
      %s130 = sphi 0, %s116
      %s134 = sphi 0, %s134
      %s136 = sphi 0, %s134
      %s137 = sphi 0, %s136
      %s151 = sphi 0, %s137
      %s157 = sphi 0, %s159
      %s160 = sphi 0, %s157
      %s161 = sphi 0, %s160
      %s177 = sphi 0, %s161
    $region4: #{tpu_custom_call.1} parent=1 // loop_header_branch
      %19 = sbr.rel (%p17) target = $region8
    $region5: #{tpu_custom_call.1} parent=1 // loop_body
      %s21 = ssub.s32 %s16, 1
      %s22 = ssub.s32 %s16, 2
      %s23 = sadd.s32 %s16, 1
      %s24 = ssub.s32 %s16, %s23
      %p25 = scmp.eq.s32.totalorder %s24, 0
      %s27 = sadd.s32 %s26, 1
      %s28 = scalar_select %p25, %s26, %s27
      %p31 = pneg %p25
      %p32 = scmp.eq.s32.totalorder %s16, 1
      %p33 = por %p31, %p32
      %p34 = scmp.ne.s32.totalorder %s26, %s29
      %p35 = scmp.eq.s32.totalorder %s16, 0
      %p36 = por %p34, %p35
      %p37 = scmp.ne.s32.totalorder %s26, %s29
      %p38 = scmp.eq.s32.totalorder %s21, 1
      %p39 = por %p37, %p38
      %p40 = scmp.ne.s32.totalorder %s29, %s30
      %p41 = scmp.eq.s32.totalorder %s21, 0
      %p42 = por %p40, %p41
      %p43 = scmp.ne.s32.totalorder %s29, %s30
      %p44 = scmp.eq.s32.totalorder %s22, 1
      %p45 = por %p43, %p44
      %p47 = scmp.ne.s32.totalorder %s30, %s46
      %p48 = scmp.eq.s32.totalorder %s22, 0
      %p49 = por %p47, %p48
      %s51 = sadd.s32 %s50, 1
      %p54 = scmp.eq.s32.totalorder %s16, 1
      %p55 = scmp.ne.s32.totalorder %s50, %s52
      %p56 = scmp.eq.s32.totalorder %s16, 0
      %p57 = por %p55, %p56
      %p58 = scmp.ne.s32.totalorder %s50, %s52
      %p59 = scmp.eq.s32.totalorder %s21, 1
      %p60 = por %p58, %p59
      %p61 = scmp.ne.s32.totalorder %s52, %s53
      %p62 = scmp.eq.s32.totalorder %s21, 0
      %p63 = por %p61, %p62
      %p64 = scmp.ne.s32.totalorder %s52, %s53
      %p65 = scmp.eq.s32.totalorder %s22, 1
      %p66 = por %p64, %p65
      %p68 = scmp.ne.s32.totalorder %s53, %s67
      %p69 = scmp.eq.s32.totalorder %s22, 0
      %p70 = por %p68, %p69
      %s72 = sadd.s32 %s71, 1
      %p75 = scmp.eq.s32.totalorder %s16, 1
      %p76 = scmp.ne.s32.totalorder %s71, %s73
      %p77 = scmp.eq.s32.totalorder %s16, 0
      %p78 = por %p76, %p77
      %p79 = scmp.ne.s32.totalorder %s71, %s73
      %p80 = scmp.eq.s32.totalorder %s21, 1
      %p81 = por %p79, %p80
      %p82 = scmp.ne.s32.totalorder %s73, %s74
      %p83 = scmp.eq.s32.totalorder %s21, 0
      %p84 = por %p82, %p83
      %p85 = scmp.ne.s32.totalorder %s73, %s74
      %p86 = scmp.eq.s32.totalorder %s22, 1
      %p87 = por %p85, %p86
      %p89 = scmp.ne.s32.totalorder %s74, %s88
      %p90 = scmp.eq.s32.totalorder %s22, 0
      %p91 = por %p89, %p90
      %s93 = sadd.s32 %s92, 1
      %p96 = scmp.eq.s32.totalorder %s16, 1
      %p97 = scmp.ne.s32.totalorder %s92, %s94
      %p98 = scmp.eq.s32.totalorder %s16, 0
      %p99 = por %p97, %p98
      %p100 = scmp.ne.s32.totalorder %s92, %s94
      %p101 = scmp.eq.s32.totalorder %s21, 1
      %p102 = por %p100, %p101
      %p103 = scmp.ne.s32.totalorder %s94, %s95
      %p104 = scmp.eq.s32.totalorder %s21, 0
      %p105 = por %p103, %p104
      %p106 = scmp.ne.s32.totalorder %s94, %s95
      %p107 = scmp.eq.s32.totalorder %s22, 1
      %p108 = por %p106, %p107
      %p110 = scmp.ne.s32.totalorder %s95, %s109
      %p111 = scmp.eq.s32.totalorder %s22, 0
      %p112 = por %p110, %p111
      %s114 = sadd.s32 %s113, 1
      %p117 = scmp.eq.s32.totalorder %s16, 1
      %p118 = scmp.ne.s32.totalorder %s113, %s115
      %p119 = scmp.eq.s32.totalorder %s16, 0
      %p120 = por %p118, %p119
      %p121 = scmp.ne.s32.totalorder %s113, %s115
      %p122 = scmp.eq.s32.totalorder %s21, 1
      %p123 = por %p121, %p122
      %p124 = scmp.ne.s32.totalorder %s115, %s116
      %p125 = scmp.eq.s32.totalorder %s21, 0
      %p126 = por %p124, %p125
      %p127 = scmp.ne.s32.totalorder %s115, %s116
      %p128 = scmp.eq.s32.totalorder %s22, 1
      %p129 = por %p127, %p128
      %p131 = scmp.ne.s32.totalorder %s116, %s130
      %p132 = scmp.eq.s32.totalorder %s22, 0
      %p133 = por %p131, %p132
      %s135 = sadd.s32 %s134, 1
      %p138 = scmp.eq.s32.totalorder %s16, 1
      %p139 = scmp.ne.s32.totalorder %s134, %s136
      %p140 = scmp.eq.s32.totalorder %s16, 0
      %p141 = por %p139, %p140
      %p142 = scmp.ne.s32.totalorder %s134, %s136
      %p143 = scmp.eq.s32.totalorder %s21, 1
      %p144 = por %p142, %p143
      %p145 = scmp.ne.s32.totalorder %s136, %s137
      %p146 = scmp.eq.s32.totalorder %s21, 0
      %p147 = por %p145, %p146
      %p148 = scmp.ne.s32.totalorder %s136, %s137
      %p149 = scmp.eq.s32.totalorder %s22, 1
      %p150 = por %p148, %p149
      %p152 = scmp.ne.s32.totalorder %s137, %s151
      %p153 = scmp.eq.s32.totalorder %s22, 0
      %p154 = por %p152, %p153
      %s155 = ssub.s32 %s16, %s23
      %p156 = scmp.eq.s32.totalorder %s155, 0
      %s158 = sadd.s32 %s157, 1
      %s159 = scalar_select %p156, %s157, %s158
      %p162 = pneg %p156
      %p163 = scmp.eq.s32.totalorder %s16, 1
      %p164 = por %p162, %p163
      %p165 = scmp.ne.s32.totalorder %s157, %s160
      %p166 = scmp.eq.s32.totalorder %s16, 0
      %p167 = por %p165, %p166
      %p168 = scmp.ne.s32.totalorder %s157, %s160
      %p169 = scmp.eq.s32.totalorder %s21, 1
      %p170 = por %p168, %p169
      %p171 = scmp.ne.s32.totalorder %s160, %s161
      %p172 = scmp.eq.s32.totalorder %s21, 0
      %p173 = por %p171, %p172
      %p174 = scmp.ne.s32.totalorder %s160, %s161
      %p175 = scmp.eq.s32.totalorder %s22, 1
      %p176 = por %p174, %p175
      %p178 = scmp.ne.s32.totalorder %s161, %s177
      %p179 = scmp.eq.s32.totalorder %s22, 0
      %p180 = por %p178, %p179
      %p181 = scmp.le.s32.totalorder 1, %s16
      %p182 = scmp.lt.s32.totalorder %s16, 3
      %p183 = pnand %p181, %p182
      %p184 = pneg %p183
      // Predicated region
      $region9: #{tpu_custom_call.1} parent=5 // pred_check
        _
      $region10: #{tpu_custom_call.1} parent=5 // pred_check_branch
        %186 = sbr.rel (%p183) target = $region12
      $region11: #{tpu_custom_call.1} parent=5 // pred_region
        %s187 = ssub.s32 %s16, 1
        // Predicated region
        $region13: #{tpu_custom_call.1} parent=11 // pred_check
          %p188 = pneg %p63
        $region14: #{tpu_custom_call.1} parent=11 // pred_check_branch
          %190 = sbr.rel (%p188) target = $region16
        $region15: #{tpu_custom_call.1} parent=11 // pred_region
          _
        $region16: #{tpu_custom_call.1} parent=11 // pred_fallthru
          _
        // Predicated region
        $region17: #{tpu_custom_call.1} parent=11 // pred_check
          %p191 = pneg %p84
        $region18: #{tpu_custom_call.1} parent=11 // pred_check_branch
          %193 = sbr.rel (%p191) target = $region20
        $region19: #{tpu_custom_call.1} parent=11 // pred_region
          _
        $region20: #{tpu_custom_call.1} parent=11 // pred_fallthru
          _
        // Predicated region
        $region21: #{tpu_custom_call.1} parent=11 // pred_check
          %p194 = pneg %p105
        $region22: #{tpu_custom_call.1} parent=11 // pred_check_branch
          %196 = sbr.rel (%p194) target = $region24
        $region23: #{tpu_custom_call.1} parent=11 // pred_region
          %s198 = ssub.s32 768, 768
          %199 = vsyncadd [#allocation3], %s198
          %s200 = sshll.u32 [#allocation2], 4
          %s201 = int_to_ptr.vmem [resolvable:$true] %s200
          %206 = dma.hbm_to_vmem [thread:$0]  %s3, 768, %s201, [#allocation3], 128, 128, 8
        $region24: #{tpu_custom_call.1} parent=11 // pred_fallthru
          _
        // Predicated region
        $region25: #{tpu_custom_call.1} parent=11 // pred_check
          %p207 = pneg %p126
        $region26: #{tpu_custom_call.1} parent=11 // pred_check_branch
          %209 = sbr.rel (%p207) target = $region28
        $region27: #{tpu_custom_call.1} parent=11 // pred_region
          _
        $region28: #{tpu_custom_call.1} parent=11 // pred_fallthru
          _
        // Predicated region
        $region29: #{tpu_custom_call.1} parent=11 // pred_check
          %p210 = pneg %p147
        $region30: #{tpu_custom_call.1} parent=11 // pred_check_branch
          %212 = sbr.rel (%p210) target = $region32
        $region31: #{tpu_custom_call.1} parent=11 // pred_region
          _
        $region32: #{tpu_custom_call.1} parent=11 // pred_fallthru
          _
      $region12: #{tpu_custom_call.1} parent=5 // pred_fallthru
        _
      %p213 = scmp.lt.s32.totalorder %s16, 2
      // Predicated region
      $region33: #{tpu_custom_call.1} parent=5 // pred_check
        %p214 = pneg %p213
      $region34: #{tpu_custom_call.1} parent=5 // pred_check_branch
        %216 = sbr.rel (%p214) target = $region36
      $region35: #{tpu_custom_call.1} parent=5 // pred_region
        // Predicated region
        $region37: #{tpu_custom_call.1} parent=35 // pred_check
          %p217 = pneg %p36
        $region38: #{tpu_custom_call.1} parent=35 // pred_check_branch
          %219 = sbr.rel (%p217) target = $region40
        $region39: #{tpu_custom_call.1} parent=35 // pred_region
          %p220 = scmp.lt.s32.totalorder %s16, 1
          %s221 = scalar_select %p220, %s16, 1
          %s222 = smul.addr %s221, 8
          %s223 = scalar_lea.vmem %s0, %s222
        $region40: #{tpu_custom_call.1} parent=35 // pred_fallthru
          _
      $region36: #{tpu_custom_call.1} parent=5 // pred_fallthru
        _
      %p224 = scmp.le.s32.totalorder 1, %s16
      %p225 = scmp.lt.s32.totalorder %s16, 3
      %p226 = pnand %p224, %p225
      %p227 = pneg %p226
      // Predicated region
      $region41: #{tpu_custom_call.1} parent=5 // pred_check
        _
      $region42: #{tpu_custom_call.1} parent=5 // pred_check_branch
        %229 = sbr.rel (%p226) target = $region44
      $region43: #{tpu_custom_call.1} parent=5 // pred_region
        %s230 = ssub.s32 %s16, 1
        // Predicated region
        $region45: #{tpu_custom_call.1} parent=43 // pred_check
          %p231 = pneg %p105
        $region46: #{tpu_custom_call.1} parent=43 // pred_check_branch
          %233 = sbr.rel (%p231) target = $region48
        $region47: #{tpu_custom_call.1} parent=43 // pred_region
          %234 = dma.done [#allocation3], 768
        $region48: #{tpu_custom_call.1} parent=43 // pred_fallthru
          _
        %p235 = scmp.lt.s32.totalorder %s21, 1
        %s236 = scalar_select %p235, %s21, 1
        %s237 = smul.addr %s236, 8
        %s238 = scalar_lea.vmem %s0, %s237
        %p239 = pneg %p42
        %p240 = pneg %p39
        %p241 = pneg %p63
        %p242 = pneg %p60
        %p243 = pneg %p84
        %p244 = pneg %p81
        %p245 = pneg %p105
        %p246 = pneg %p102
        %p247 = pneg %p126
        %p248 = pneg %p123
        %p249 = pneg %p147
        %p250 = pneg %p144
        %p251 = pneg %p173
        %p252 = pneg %p170
        %s253 = sand.u32 %s160, 1
        %s254 = scalar_lea.sflag [#allocation4], %s253
        %s255 = sand.u32 %s160, 1
        %s256 = smul.addr %s255, 8
        %s257 = scalar_lea.vmem [#allocation5], %s256
        %p258 = scmp.lt.s32.totalorder %s21, 1
        %s259 = scalar_select %p258, %s21, 1
        %s260 = smul.addr %s259, 8
        %s261 = scalar_lea.vmem %s0, %s260
        %v262 = vld [vmem:[%s261] sm:$0xff]
        %v263 = vld [vmem:[%s1] sm:$0x7]
        %265 = vset.pattern.permute.xlu0 0
        %266 = vperm.xlu0 %265, %v262
        %v267 = vpop.permute.xlu0 %266
        %v269 = vlaneseq
        %v270 = vshrl.u32 %v269, 7
        %v271 = vsub.s32 0, %v270
        %v272 = vrot.slane %v263, %v271
        %v273 = vmul.f32 %v267, %v272
        %274 = vset.pattern.permute.xlu0 1
        %275 = vperm.xlu0 %274, %v262
        %v276 = vpop.permute.xlu0 %275
        %v278 = vlaneseq
        %v279 = vshrl.u32 %v278, 7
        %v280 = vsub.s32 1, %v279
        %v281 = vrot.slane %v263, %v280
        %v282 = vmul.f32 %v276, %v281
        %v283 = vadd.f32 %v273, %v282
        %284 = vset.pattern.permute.xlu0 2
        %285 = vperm.xlu0 %284, %v262
        %v286 = vpop.permute.xlu0 %285
        %v288 = vlaneseq
        %v289 = vshrl.u32 %v288, 7
        %v290 = vsub.s32 2, %v289
        %v291 = vrot.slane %v263, %v290
        %v292 = vmul.f32 %v286, %v291
        %v293 = vadd.f32 %v283, %v292
        %v294 = vld [vmem:[%s2] sm:$0x1]
        %v296 = vlaneseq
        %v297 = vshrl.u32 %v296, 7
        %v298 = vsub.s32 0, %v297
        %v299 = vrot.slane %v294, %v298
        %v301 = vadd.f32 %v293, %v299
        %v302 = vand.u32 2147483647, %v301
        %vm303 = vcmp.le.f32.partialorder %v302, 0.7853982
        %vm304 = vcmp.lt.s32.totalorder %v301, 0
        %v305 = vand.u32 %v301, 2139095040
        %v306 = vshrl.u32 %v305, 23
        %v307 = vsub.s32 %v306, 127
        %v308 = vand.u32 2147483647, %v301
        %v309 = vand.u32 %v308, 8388607
        %v310 = vor.u32 %v309, 8388608
        %v311 = vsub.s32 0, %v310
        %v312 = vadd.s32 %v307, 1
        %vm313 = vcmp.gt.s32.totalorder %v312, 0
        %v314 = vsel %vm313, %v312, 0
        %v315 = vshrl.u32 %v314, 5
        %v316 = vand.u32 %v314, 31
        %v317 = vsub.s32 32, %v316
        %v318 = vshrl.u32 683565275, %v317
        %v319 = vshll.u32 683565275, %v316
        %v320 = vshrl.u32 2475754826, %v317
        %v321 = vor.u32 %v319, %v320
        %v322 = vshll.u32 2475754826, %v316
        %v323 = vshrl.u32 2131351028, %v317
        %v324 = vor.u32 %v322, %v323
        %v325 = vshll.u32 2131351028, %v316
        %v326 = vshrl.u32 2102212464, %v317
        %v327 = vor.u32 %v325, %v326
        %v328 = vshll.u32 2102212464, %v316
        %v329 = vshrl.u32 920167782, %v317
        %v330 = vor.u32 %v328, %v329
        %v331 = vshll.u32 920167782, %v316
        %v332 = vshrl.u32 1326507024, %v317
        %v333 = vor.u32 %v331, %v332
        %vm334 = vcmp.lt.s32.totalorder %v315, 1
        %vm335 = vcmp.lt.s32.totalorder %v315, 2
        %vm336 = vcmp.lt.s32.totalorder %v315, 3
        %vm337 = vcmp.lt.s32.totalorder %v315, 4
        %v338 = vsel %vm334, %v318, %v321
        %v339 = vsel %vm337, %v327, 2102212464
        %v340 = vsel %vm336, %v324, %v339
        %v341 = vsel %vm335, %v338, %v340
        %v342 = vsel %vm334, %v321, %v324
        %v343 = vsel %vm337, %v330, 920167782
        %v344 = vsel %vm336, %v327, %v343
        %v345 = vsel %vm335, %v342, %v344
        %v346 = vsel %vm334, %v324, %v327
        %v347 = vsel %vm337, %v333, 1326507024
        %v348 = vsel %vm336, %v330, %v347
        %v349 = vsel %vm335, %v346, %v348
        %v350 = vshll.u32 %v310, 8
        %v351 = vmul.u32.u64.compose %v350, %v349
        %v352 = vextract.low.u32 %v351
        %v353 = vextract.high.u32 %v351
        %v354 = vmul.u32.u64.compose %v350, %v345
        %v355 = vextract.low.u32 %v354
        %v356 = vextract.high.u32 %v354
        %v357 = vmul.u32 %v350, %v341
        %v358 = vadd.s32 %v353, %v355
        %vm359 = vc.u32 %v353, %v355
        %v360 = vadd.s32 %v356, 1
        %v361 = vsel %vm359, %v360, %v356
        %v362 = vadd.s32 %v357, %v361
        %v363 = vadd.s32 %v362, 536870912
        %v364 = vshrl.u32 %v363, 30
        %v365 = vshll.u32 %v364, 30
        %v366 = vsub.s32 %v362, %v365
        %vm367 = vcmp.lt.s32.totalorder %v366, 0
        %v368 = vsub.s32 0, %v366
        %v369 = vsel %vm367, %v368, %v366
        %v370 = vclz %v369
        %v371 = vsub.s32 %v370, 2
        %vm372 = vcmp.gt.s32.totalorder 0, %v371
        %v373 = vsel %vm372, 0, %v371
        %v374 = vsub.s32 32, %v373
        %v375 = vshll.u32 %v366, %v373
        %v376 = vshrl.u32 %v358, %v374
        %v377 = vor.u32 %v375, %v376
        %v378 = vsub.s32 4294967266, %v373
        %v379 = vadd.s32 %v378, 127
        %v380 = vshll.u32 %v379, 23
        %v381 = vor.u32 4788187, %v380
        %v382 = vand.u32 2147483647, %v381
        %v384 = vcvt.s32.f32 %v377
        %v385 = vmul.f32 %v384, %v382
        %v386 = vxor.u32 %v385, 2147483648
        %v387 = vsel %vm304, %v386, %v385
        %v388 = vsub.s32 4, %v364
        %v389 = vsel %vm304, %v388, %v364
        %v390 = vsel %vm303, %v301, %v387
        %v391 = vsel %vm303, 0, %v389
        %v392 = vcosq.f32.pop %v390
        %v393 = vsinq.f32.pop %v390
        %vm394 = vweird.f32 %v301
        %v395 = vadd.s32 %v391, 3
        %v396 = vand.u32 %v395, 3
        %vm397 = vcmp.lt.s32.totalorder %v396, 2
        %vm398 = vcmp.eq.s32.totalorder %v396, 0
        %v399 = vxor.u32 %v393, 2147483648
        %v400 = vsel %vm398, %v392, %v399
        %vm401 = vcmp.eq.s32.totalorder %v396, 2
        %v402 = vxor.u32 %v392, 2147483648
        %v403 = vsel %vm401, %v402, %v393
        %v404 = vsel %vm397, %v400, %v403
        %v405 = vsel %vm394, nan, %v404
        %v406 = vld [vmem:[#allocation2] sm:$0xff]
        %v407 = vld [vmem:[#allocation2 + $0x8] sm:$0xff]
        %v408 = vld [vmem:[#allocation2 + $0x10] sm:$0xff]
        %v409 = vld [vmem:[#allocation2 + $0x18] sm:$0xff]
        %v410 = vld [vmem:[#allocation2 + $0x20] sm:$0xff]
        %v411 = vld [vmem:[#allocation2 + $0x28] sm:$0xff]
        %v412 = vld [vmem:[%s4] sm:$0x7]
        %v413 = vlaneseq
        %v414 = vshrl.u32 %v413, 7
        %v415 = vsub.s32 0, %v414
        %v416 = vrot.slane %v412, %v415
        %v417 = vmul.f32 %v267, %v416
        %vm418 = vcmask 392192
        %v420 = vsel %vm418, %v405, 0
        %422 = vmatprep.subr.mxu0 0.0
        %423 = vmatpush1.msra.mxu0 %v406
        %424 = vmatprep.subr.mxu0 0.0
        %425 = vmatpush1.msra.mxu0 %v407
        %426 = vmatprep.subr.mxu0 0.0
        %427 = vmatpush1.msra.mxu0 %v408
        %428 = vmatprep.subr.mxu0 0.0
        %429 = vmatpush1.msra.mxu0 %v409
        %430 = vmatprep.subr.mxu0 0.0
        %431 = vmatpush1.msra.mxu0 %v410
        %432 = vmatprep.subr.mxu0 0.0
        %433 = vmatpush1.msra.mxu0 %v411
        %434 = vmatprep.subr.mxu0 0.0
        %435 = vmatpush1.msra.mxu0 0.0
        %436 = vmatprep.subr.mxu0 0.0
        %437 = vmatpush1.msra.mxu0 0.0
        %438 = vmatprep.subr.mxu0 0.0
        %439 = vmatpush1.msra.mxu0 0.0
        %440 = vmatprep.subr.mxu0 0.0
        %441 = vmatpush1.msra.mxu0 0.0
        %442 = vmatprep.subr.mxu0 0.0
        %443 = vmatpush1.msra.mxu0 0.0
        %444 = vmatprep.subr.mxu0 0.0
        %445 = vmatpush1.msra.mxu0 0.0
        %446 = vmatprep.subr.mxu0 0.0
        %447 = vmatpush1.msra.mxu0 0.0
        %448 = vmatprep.subr.mxu0 0.0
        %449 = vmatpush1.msra.mxu0 0.0
        %450 = vmatprep.subr.mxu0 0.0
        %451 = vmatpush1.msra.mxu0 0.0
        %452 = vmatprep.subr.mxu0 0.0
        %453 = vmatpush1.msra.mxu0 0.0
        %454 = vmatprep.subr.mxu0 0.0
        %455 = vmatpush1.msra.mxu0 0.0
        %456 = vmatprep.subr.mxu0 0.0
        %457 = vmatpush1.msra.mxu0 0.0
        %458 = vmatprep.subr.mxu0 0.0
        %459 = vmatpush1.msra.mxu0 0.0
        %460 = vmatprep.subr.mxu0 0.0
        %461 = vmatpush1.msra.mxu0 0.0
        %462 = vmatprep.subr.mxu0 0.0
        %463 = vmatpush1.msra.mxu0 0.0
        %464 = vmatprep.subr.mxu0 0.0
        %465 = vmatpush1.msra.mxu0 0.0
        %466 = vmatprep.subr.mxu0 0.0
        %467 = vmatpush1.msra.mxu0 0.0
        %468 = vmatprep.subr.mxu0 0.0
        %469 = vmatpush1.msra.mxu0 0.0
        %470 = vmatprep.subr.mxu0 0.0
        %471 = vmatpush1.msra.mxu0 0.0
        %472 = vmatprep.subr.mxu0 0.0
        %473 = vmatpush1.msra.mxu0 0.0
        %474 = vmatprep.subr.mxu0 0.0
        %475 = vmatpush1.msra.mxu0 0.0
        %476 = vmatprep.subr.mxu0 0.0
        %477 = vmatpush1.msra.mxu0 0.0
        %478 = vmatprep.subr.mxu0 0.0
        %479 = vmatpush1.msra.mxu0 0.0
        %480 = vmatprep.subr.mxu0 0.0
        %481 = vmatpush1.msra.mxu0 0.0
        %482 = vmatprep.subr.mxu0 0.0
        %483 = vmatpush1.msra.mxu0 0.0
        %484 = vmatprep.subr.mxu0 0.0
        %485 = vmatpush1.msra.mxu0 0.0
        %486 = vmatprep.mubr.f32.mxu0 0.0
        %487 = vmatmul.mubr.f32.gmra.mrb[0].mxu0 %v420
        %v488 = vpop.f32.mrb[0].mxu0
        %v489 = vadd.f32 %v417, %v488
        %v490 = vpop.f32.mrb[0].mxu0
        %491 = vdwg.mxu0
        %v492 = vlaneseq
        %v493 = vshrl.u32 %v492, 7
        %v494 = vsub.s32 1, %v493
        %v495 = vrot.slane %v412, %v494
        %v496 = vmul.f32 %v276, %v495
        %v497 = vadd.f32 %v489, %v496
        %v498 = vlaneseq
        %v499 = vshrl.u32 %v498, 7
        %v500 = vsub.s32 2, %v499
        %v501 = vrot.slane %v412, %v500
        %v502 = vmul.f32 %v286, %v501
        %v503 = vadd.f32 %v497, %v502
        %v504 = vld [vmem:[%s5] sm:$0x1]
        %v506 = vlaneseq
        %v507 = vshrl.u32 %v506, 7
        %v508 = vsub.s32 0, %v507
        %v509 = vrot.slane %v504, %v508
        %v511 = vadd.f32 %v503, %v509
        %512 = vst [vmem:[%s257] sm:$0xff] %v511
        %s513 = sand.u32 %s160, 1
        %s514 = scalar_lea.sflag [#allocation4], %s513
        %s515 = sand.u32 %s160, 1
        %s516 = smul.addr %s515, 8
        %s517 = scalar_lea.vmem [#allocation5], %s516
        // Predicated region
        $region49: #{tpu_custom_call.1} parent=43 // pred_check
          %p518 = pneg %p170
        $region50: #{tpu_custom_call.1} parent=43 // pred_check_branch
          %520 = sbr.rel (%p518) target = $region52
        $region51: #{tpu_custom_call.1} parent=43 // pred_region
          %s522 = ssub.s32 128, 128
          %523 = vsyncadd %s514, %s522
          %s524 = smul.addr %s21, 128
          %s525 = scalar_lea.hbm %s6, %s524
          %s527 = sshll.u32 %s517, 4
          %s528 = int_to_ptr.vmem [resolvable:$true] %s527
          %530 = dma.vmem_to_hbm [thread:$0]  %s528, 128, %s525, %s514
        $region52: #{tpu_custom_call.1} parent=43 // pred_fallthru
          _
      $region44: #{tpu_custom_call.1} parent=5 // pred_fallthru
        _
      %p531 = scmp.le.s32.totalorder 2, %s16
      // Predicated region
      $region53: #{tpu_custom_call.1} parent=5 // pred_check
        %p532 = pneg %p531
      $region54: #{tpu_custom_call.1} parent=5 // pred_check_branch
        %534 = sbr.rel (%p532) target = $region56
      $region55: #{tpu_custom_call.1} parent=5 // pred_region
        %s535 = ssub.s32 %s16, 2
        // Predicated region
        $region57: #{tpu_custom_call.1} parent=55 // pred_check
          %p536 = pneg %p176
        $region58: #{tpu_custom_call.1} parent=55 // pred_check_branch
          %538 = sbr.rel (%p536) target = $region60
        $region59: #{tpu_custom_call.1} parent=55 // pred_region
          %s539 = sand.u32 %s161, 1
          %s540 = scalar_lea.sflag [#allocation4], %s539
          %s541 = sand.u32 %s161, 1
          %s542 = smul.addr %s541, 8
          %s543 = scalar_lea.vmem [#allocation5], %s542
          %544 = dma.done %s540, 128
        $region60: #{tpu_custom_call.1} parent=55 // pred_fallthru
          _
      $region56: #{tpu_custom_call.1} parent=5 // pred_fallthru
        _
    $region6: #{tpu_custom_call.1} parent=1 // loop_footer
      %s20 = sadd.s32 1, %s16
    $region7: #{tpu_custom_call.1} parent=1 // loop_footer_branch
      %15 = sbr.rel target = $region3
    $region8: #{tpu_custom_call.1} parent=1 // loop_exit
      _
    %545 = vsyncpa [#allocation3], 1
    %s546 = scalar_lea.sflag [#allocation3], 1
    %547 = vsyncpa %s546, 1
    %548 = vsyncpa [#allocation4], 1
    %s549 = scalar_lea.sflag [#allocation4], 1
    %550 = vsyncpa %s549, 1

</llo_original>
